<compile_context>
chip_gen: v5e
topology: v5e:2x2
jax: 0.10.0
libtpu: 0.0.40
codegen_flags: <defaults>
</compile_context>

<pallas_src>
import jax
import jax.numpy as jnp
from jax.experimental import pallas as pl
from jax.experimental.pallas import tpu as pltpu
import numpy as np


# ----------------------- Pallas kernel -----------------------

def mixhop_fused_kernel(x_ref, w1_ref, b1_ref, adj_ref, w2_ref, b2_ref, o_ref):
    """Fused MixHop forward: layer1 (3 hops) + layer2 + log_softmax.

    x_ref   : (N, F)      bf16
    w1_ref  : (F, 3H)     bf16   (three hop weights fused column-wise)
    b1_ref  : (1, 3H)     f32
    adj_ref : (N, N)      bf16   (row-normalized dense adjacency)
    w2_ref  : (3, H, C)   bf16   (layer-2 weight split per hop block)
    b2_ref  : (1, C)      f32
    o_ref   : (N, C)      f32
    """
    H = w2_ref.shape[1]
    x = x_ref[...]                       # (N, F)  bf16
    adj = adj_ref[...]                   # (N, N)  bf16
    cdt = adj.dtype

    # ---- layer 1 --------------------------------------------------------
    # single fused GEMM for the three hop linears: (N, F) @ (F, 3H) + b, f32 accumulate
    xw = jnp.dot(x, w1_ref[...], preferred_element_type=jnp.float32) + b1_ref[...]

    # hop 0: A_0 = I  ->  no adjacency matmul at all
    h0 = jnp.maximum(xw[:, 0:H], 0.0)
    # hop 1: A_1 = adj
    h1 = jnp.maximum(
        jnp.dot(adj, xw[:, H:2 * H].astype(cdt), preferred_element_type=jnp.float32), 0.0)
    # hop 2: A_2 = adj ** 2 (elementwise), squared in-kernel on the VPU
    adj2 = adj * adj
    h2 = jnp.maximum(
        jnp.dot(adj2, xw[:, 2 * H:3 * H].astype(cdt), preferred_element_type=jnp.float32), 0.0)

    # ---- layer 2 --------------------------------------------------------
    # relu(concat([h0,h1,h2])) @ W2  ==  sum_k h_k @ W2[k]   (avoids a lane concat)
    y = (jnp.dot(h0.astype(cdt), w2_ref[0], preferred_element_type=jnp.float32)
         + jnp.dot(h1.astype(cdt), w2_ref[1], preferred_element_type=jnp.float32)
         + jnp.dot(h2.astype(cdt), w2_ref[2], preferred_element_type=jnp.float32)
         + b2_ref[...])
    z = jnp.dot(adj, y.astype(cdt), preferred_element_type=jnp.float32)

    # ---- log_softmax over the class axis (f32) --------------------------
    m = jnp.max(z, axis=1, keepdims=True)
    lse = jnp.log(jnp.sum(jnp.exp(z - m), axis=1, keepdims=True)) + m
    o_ref[...] = z - lse


# ----------------------- wrapper -----------------------

def mixhop_forward(x, adj, params):
    """x: [N, F] f32, adj: [N, N] f32 (row-normalized) -> log_softmax logits [N, C]."""
    w1_all = params["w1_all"]            # (F, 3H)   bf16
    b1 = params["b1"]                    # (1, 3H)   f32
    w2 = params["w2"]                    # (3, H, C) bf16
    b2 = params["b2"]                    # (1, C)    f32

    N, F = x.shape
    _, H, C = w2.shape

    # bf16 MXU operands (halves HBM bytes & VMEM footprint); f32 accumulation in-kernel.
    x_b = x.astype(jnp.bfloat16)
    adj_b = adj.astype(jnp.bfloat16)

    # conservative VMEM working-set estimate (inputs x2 for pipeline buffering)
    vmem_est = (2 * 2 * (N * F + N * N + F * 3 * H + 3 * H * C)   # bf16 inputs
                + 2 * N * N                                        # in-kernel adj**2 (bf16)
                + 4 * (N * 3 * H + 3 * N * H + 3 * N * C))         # f32 intermediates + out
    assert vmem_est < 44 * 1024 * 1024, (
        "graph too large for the fused single-call kernel; use a row-tiled "
        "two-pass variant (see TODO at top of file)")

    flops = (2 * N * F * 3 * H           # fused x @ W1_all
             + 2 * 2 * N * N * H         # hop-1 / hop-2 adjacency matmuls
             + 2 * N * 3 * H * C         # layer-2 linear (three partial GEMMs)
             + 2 * N * N * C)            # layer-2 adjacency matmul
    cost = pl.CostEstimate(
        flops=flops,
        transcendentals=N * (C + 1),     # exp + log in log_softmax
        bytes_accessed=(2 * (N * F + N * N + F * 3 * H + 3 * H * C)
                        + 4 * (3 * H + C) + 4 * N * C))

    return pl.pallas_call(
        mixhop_fused_kernel,
        out_shape=jax.ShapeDtypeStruct((N, C), jnp.float32),
        in_specs=[
            pl.BlockSpec((N, F), lambda: (0, 0)),
            pl.BlockSpec((F, 3 * H), lambda: (0, 0)),
            pl.BlockSpec((1, 3 * H), lambda: (0, 0)),
            pl.BlockSpec((N, N), lambda: (0, 0)),
            pl.BlockSpec((3, H, C), lambda: (0, 0, 0)),
            pl.BlockSpec((1, C), lambda: (0, 0)),
        ],
        out_specs=pl.BlockSpec((N, C), lambda: (0, 0)),
        compiler_params=pltpu.CompilerParams(vmem_limit_bytes=48 * 1024 * 1024),
        cost_estimate=cost,
    )(x_b, w1_all, b1, adj_b, w2, b2)


# ----------------------- reference (pure jnp, f32) -----------------------

def mixhop_reference(x, adj, params):
    """f32 reference using the same bf16-rounded operands as the kernel."""
    w1 = params["w1_all"].astype(jnp.float32)
    b1 = params["b1"]
    w2 = params["w2"].astype(jnp.float32)
    b2 = params["b2"]
    H = w2.shape[1]
    xf = x.astype(jnp.bfloat16).astype(jnp.float32)
    af = adj.astype(jnp.bfloat16).astype(jnp.float32)
    xw = xf @ w1 + b1
    h = jnp.concatenate(
        [xw[:, :H], af @ xw[:, H:2 * H], (af * af) @ xw[:, 2 * H:]], axis=1)
    h = jnp.maximum(h, 0.0)
    z = af @ (h @ w2.reshape(3 * H, -1) + b2)
    return jax.nn.log_softmax(z, axis=1)


# ----------------------- parameter / data setup -----------------------

def xavier_uniform(key, out_f, in_f, gain=1.414):
    bound = gain * np.sqrt(6.0 / (in_f + out_f))
    return jax.random.uniform(key, (out_f, in_f), jnp.float32, -bound, bound)


def init_params(key, nfeat, nhid, nclass):
    keys = jax.random.split(key, 4)
    # layer 1: three Linear(nfeat, nhid); fused & pre-transposed to [nfeat, 3*nhid]
    w1_all = jnp.concatenate(
        [xavier_uniform(keys[i], nhid, nfeat).T for i in range(3)], axis=1)
    b1 = jnp.zeros((1, 3 * nhid), jnp.float32)
    # layer 2: Linear(3*nhid, nclass); pre-transposed and split per hop block: [3, H, C]
    w2 = xavier_uniform(keys[3], nclass, 3 * nhid).T.reshape(3, nhid, nclass)
    b2 = jnp.zeros((1, nclass), jnp.float32)
    return {
        "w1_all": w1_all.astype(jnp.bfloat16),
        "b1": b1,
        "w2": w2.astype(jnp.bfloat16),
        "b2": b2,
    }


def make_graph(key, num_nodes):
    A = (jax.random.uniform(key, (num_nodes, num_nodes)) < 0.2).astype(jnp.float32)
    A = jnp.maximum(A, A.T)
    A = A + jnp.eye(num_nodes, dtype=jnp.float32)
    deg = jnp.sum(A, axis=1, keepdims=True)
    return A / deg  # row-normalized dense adjacency


if __name__ == "__main__":
    N, nfeat, nhid, nclass = 32, 16, 16, 8

    key = jax.random.PRNGKey(0)
    k_feat, k_adj, k_param = jax.random.split(key, 3)

    x = jax.random.normal(k_feat, (N, nfeat), jnp.float32)
    adj = make_graph(k_adj, N)
    params = init_params(k_param, nfeat, nhid, nclass)

    out = jax.jit(mixhop_forward)(x, adj, params)
    out = jax.block_until_ready(out)

    assert out.shape == (N, nclass)
    out_np = np.asarray(out, dtype=np.float32)
    # rows are valid log-probabilities
    assert np.allclose(np.exp(out_np).sum(axis=1), 1.0, atol=1e-3)
    # matches the pure-jnp f32 reference (bf16 MXU operands -> loose tolerance)
    ref = np.asarray(mixhop_reference(x, adj, params), dtype=np.float32)
    assert np.allclose(out_np, ref, atol=5e-2), float(np.abs(out_np - ref).max())

    print("KERNEL_OK")
</pallas_src>

<mosaic_0001>
module attributes {stable_mosaic.version = 11 : i64} {
  func.func @mixhop_fused_kernel(%arg0: memref<32x16xbf16, #tpu.memory_space<vmem>>, %arg1: memref<16x48xbf16, #tpu.memory_space<vmem>>, %arg2: memref<1x48xf32, #tpu.memory_space<vmem>>, %arg3: memref<32x32xbf16, #tpu.memory_space<vmem>>, %arg4: memref<3x16x8xbf16, #tpu.memory_space<vmem>>, %arg5: memref<1x8xf32, #tpu.memory_space<vmem>>, %arg6: memref<32x8xf32, #tpu.memory_space<vmem>>) attributes {dimension_semantics = [], scalar_prefetch = 0 : i64, scratch_operands = 0 : i64, tpu.core_type = #tpu.core_type<tc>} {
    %c0 = arith.constant 0 : index
    %c0_0 = arith.constant 0 : index
    %0 = vector.load %arg0[%c0, %c0_0] : memref<32x16xbf16, #tpu.memory_space<vmem>>, vector<32x16xbf16>
    %c0_1 = arith.constant 0 : index
    %c0_2 = arith.constant 0 : index
    %1 = vector.load %arg3[%c0_1, %c0_2] : memref<32x32xbf16, #tpu.memory_space<vmem>>, vector<32x32xbf16>
    %c0_3 = arith.constant 0 : index
    %c0_4 = arith.constant 0 : index
    %2 = vector.load %arg1[%c0_3, %c0_4] : memref<16x48xbf16, #tpu.memory_space<vmem>>, vector<16x48xbf16>
    %cst = arith.constant dense<0.000000e+00> : vector<32x48xf32>
    %3 = tpu.matmul %0, %2, %cst {dimension_numbers = #tpu.dot_dimension_numbers<[1], [0], [0], [1], [0, 0, 1, 1], [], []>} : vector<32x16xbf16>, vector<16x48xbf16>, vector<32x48xf32> -> vector<32x48xf32>
    %c0_5 = arith.constant 0 : index
    %c0_6 = arith.constant 0 : index
    %4 = vector.load %arg2[%c0_5, %c0_6] : memref<1x48xf32, #tpu.memory_space<vmem>>, vector<1x48xf32>
    %5 = vector.broadcast %4 : vector<1x48xf32> to vector<32x48xf32>
    %6 = arith.addf %3, %5 : vector<32x48xf32>
    %7 = vector.extract_strided_slice %6 {offsets = [0, 0], sizes = [32, 16], strides = [1, 1]} : vector<32x48xf32> to vector<32x16xf32>
    %cst_7 = arith.constant 0.000000e+00 : f32
    %8 = vector.broadcast %cst_7 : f32 to vector<32x16xf32>
    %9 = arith.maximumf %7, %8 : vector<32x16xf32>
    %10 = vector.extract_strided_slice %6 {offsets = [0, 16], sizes = [32, 16], strides = [1, 1]} : vector<32x48xf32> to vector<32x16xf32>
    %11 = arith.truncf %10 : vector<32x16xf32> to vector<32x16xbf16>
    %cst_8 = arith.constant dense<0.000000e+00> : vector<32x16xf32>
    %12 = tpu.matmul %1, %11, %cst_8 {dimension_numbers = #tpu.dot_dimension_numbers<[1], [0], [0], [1], [0, 0, 1, 1], [], []>} : vector<32x32xbf16>, vector<32x16xbf16>, vector<32x16xf32> -> vector<32x16xf32>
    %cst_9 = arith.constant 0.000000e+00 : f32
    %13 = vector.broadcast %cst_9 : f32 to vector<32x16xf32>
    %14 = arith.maximumf %12, %13 : vector<32x16xf32>
    %15 = arith.mulf %1, %1 : vector<32x32xbf16>
    %16 = vector.extract_strided_slice %6 {offsets = [0, 32], sizes = [32, 16], strides = [1, 1]} : vector<32x48xf32> to vector<32x16xf32>
    %17 = arith.truncf %16 : vector<32x16xf32> to vector<32x16xbf16>
    %cst_10 = arith.constant dense<0.000000e+00> : vector<32x16xf32>
    %18 = tpu.matmul %15, %17, %cst_10 {dimension_numbers = #tpu.dot_dimension_numbers<[1], [0], [0], [1], [0, 0, 1, 1], [], []>} : vector<32x32xbf16>, vector<32x16xbf16>, vector<32x16xf32> -> vector<32x16xf32>
    %cst_11 = arith.constant 0.000000e+00 : f32
    %19 = vector.broadcast %cst_11 : f32 to vector<32x16xf32>
    %20 = arith.maximumf %18, %19 : vector<32x16xf32>
    %21 = arith.truncf %9 : vector<32x16xf32> to vector<32x16xbf16>
    %c0_12 = arith.constant 0 : index
    %c0_13 = arith.constant 0 : index
    %c0_14 = arith.constant 0 : index
    %22 = vector.load %arg4[%c0_12, %c0_13, %c0_14] : memref<3x16x8xbf16, #tpu.memory_space<vmem>>, vector<1x16x8xbf16>
    %23 = vector.shape_cast %22 : vector<1x16x8xbf16> to vector<16x8xbf16>
    %cst_15 = arith.constant dense<0.000000e+00> : vector<32x8xf32>
    %24 = tpu.matmul %21, %23, %cst_15 {dimension_numbers = #tpu.dot_dimension_numbers<[1], [0], [0], [1], [0, 0, 1, 1], [], []>} : vector<32x16xbf16>, vector<16x8xbf16>, vector<32x8xf32> -> vector<32x8xf32>
    %25 = arith.truncf %14 : vector<32x16xf32> to vector<32x16xbf16>
    %c1 = arith.constant 1 : index
    %c0_16 = arith.constant 0 : index
    %c0_17 = arith.constant 0 : index
    %26 = vector.load %arg4[%c1, %c0_16, %c0_17] : memref<3x16x8xbf16, #tpu.memory_space<vmem>>, vector<1x16x8xbf16>
    %27 = vector.shape_cast %26 : vector<1x16x8xbf16> to vector<16x8xbf16>
    %cst_18 = arith.constant dense<0.000000e+00> : vector<32x8xf32>
    %28 = tpu.matmul %25, %27, %cst_18 {dimension_numbers = #tpu.dot_dimension_numbers<[1], [0], [0], [1], [0, 0, 1, 1], [], []>} : vector<32x16xbf16>, vector<16x8xbf16>, vector<32x8xf32> -> vector<32x8xf32>
    %29 = arith.addf %24, %28 : vector<32x8xf32>
    %30 = arith.truncf %20 : vector<32x16xf32> to vector<32x16xbf16>
    %c2 = arith.constant 2 : index
    %c0_19 = arith.constant 0 : index
    %c0_20 = arith.constant 0 : index
    %31 = vector.load %arg4[%c2, %c0_19, %c0_20] : memref<3x16x8xbf16, #tpu.memory_space<vmem>>, vector<1x16x8xbf16>
    %32 = vector.shape_cast %31 : vector<1x16x8xbf16> to vector<16x8xbf16>
    %cst_21 = arith.constant dense<0.000000e+00> : vector<32x8xf32>
    %33 = tpu.matmul %30, %32, %cst_21 {dimension_numbers = #tpu.dot_dimension_numbers<[1], [0], [0], [1], [0, 0, 1, 1], [], []>} : vector<32x16xbf16>, vector<16x8xbf16>, vector<32x8xf32> -> vector<32x8xf32>
    %34 = arith.addf %29, %33 : vector<32x8xf32>
    %c0_22 = arith.constant 0 : index
    %c0_23 = arith.constant 0 : index
    %35 = vector.load %arg5[%c0_22, %c0_23] : memref<1x8xf32, #tpu.memory_space<vmem>>, vector<1x8xf32>
    %36 = vector.broadcast %35 : vector<1x8xf32> to vector<32x8xf32>
    %37 = arith.addf %34, %36 : vector<32x8xf32>
    %38 = arith.truncf %37 : vector<32x8xf32> to vector<32x8xbf16>
    %cst_24 = arith.constant dense<0.000000e+00> : vector<32x8xf32>
    %39 = tpu.matmul %1, %38, %cst_24 {dimension_numbers = #tpu.dot_dimension_numbers<[1], [0], [0], [1], [0, 0, 1, 1], [], []>} : vector<32x32xbf16>, vector<32x8xbf16>, vector<32x8xf32> -> vector<32x8xf32>
    %cst_25 = arith.constant dense<0xFF800000> : vector<32xf32>
    %40 = vector.multi_reduction <maximumf>, %39, %cst_25 [1] : vector<32x8xf32> to vector<32xf32>
    %41 = vector.shape_cast %40 : vector<32xf32> to vector<32x1xf32>
    %42 = vector.broadcast %41 : vector<32x1xf32> to vector<32x8xf32>
    %43 = arith.subf %39, %42 : vector<32x8xf32>
    %44 = math.exp %43 : vector<32x8xf32>
    %cst_26 = arith.constant dense<0.000000e+00> : vector<32xf32>
    %45 = vector.multi_reduction <add>, %44, %cst_26 [1] : vector<32x8xf32> to vector<32xf32>
    %46 = vector.shape_cast %45 : vector<32xf32> to vector<32x1xf32>
    %47 = math.log %46 : vector<32x1xf32>
    %48 = arith.addf %47, %41 : vector<32x1xf32>
    %49 = vector.broadcast %48 : vector<32x1xf32> to vector<32x8xf32>
    %50 = arith.subf %39, %49 : vector<32x8xf32>
    %c0_27 = arith.constant 0 : index
    %c0_28 = arith.constant 0 : index
    %51 = vector.load %arg6[%c0_27, %c0_28] : memref<32x8xf32, #tpu.memory_space<vmem>>, vector<32x8xf32>
    tpu.vector_store %arg6[%c0_27, %c0_28], %50 {strides = array<i32>} : memref<32x8xf32, #tpu.memory_space<vmem>>, vector<32x8xf32>,
    return
  }
}

</mosaic_0001>

<llo_original>
// kernel: mixhop_forward.1
$region0: #{mixhop_forward.1}
  #allocation0 [shape = 'u32[]', space=smem, size = 0x4, offset = 0x4, fixed_abs, tag = 'smem constant byte address 0x4 - core index']
  #allocation1 [shape = 'u32[72,128]{1,0:T(1,128)}', space=vmem, size = 0x9000, scoped, tag = 'internal scratch']
  %s0 = inlined_call_operand.vmem [shape: bf16[32,16], index: 0, kind: input, shape index: {}]
  %s1 = inlined_call_operand.vmem [shape: bf16[16,48], index: 1, kind: input, shape index: {}]
  %s2 = inlined_call_operand.vmem [shape: f32[1,48], index: 2, kind: input, shape index: {}]
  %s3 = inlined_call_operand.vmem [shape: bf16[32,32], index: 3, kind: input, shape index: {}]
  %s4 = inlined_call_operand.vmem [shape: bf16[3,16,8], index: 4, kind: input, shape index: {}]
  %s5 = inlined_call_operand.vmem [shape: f32[1,8], index: 5, kind: input, shape index: {}]
  %s6 = inlined_call_operand.vmem [shape: f32[32,8], index: 6, kind: output, shape index: {}]
  %s7 = sld [smem:[#allocation0]]
  $region34: #{mixhop_forward.1} parent=0
    _
  %s9 = ssub.s32 1, %s7
  %s10 = scalar_select 0, %s9, %s7
  // Predicated region
  $region2: #{mixhop_forward.1} parent=0 // pred_check
    _
  $region3: #{mixhop_forward.1} parent=0 // pred_check_branch
    %12 = sbr.rel (0) target = $region5
  $region4: #{mixhop_forward.1} parent=0 // pred_region
    _
  $region5: #{mixhop_forward.1} parent=0 // pred_fallthru
    _
  // Predicated region
  $region6: #{mixhop_forward.1} parent=0 // pred_check
    _
  $region7: #{mixhop_forward.1} parent=0 // pred_check_branch
    %14 = sbr.rel (0) target = $region9
  $region8: #{mixhop_forward.1} parent=0 // pred_region
    _
  $region9: #{mixhop_forward.1} parent=0 // pred_fallthru
    _
  // Predicated region
  $region10: #{mixhop_forward.1} parent=0 // pred_check
    _
  $region11: #{mixhop_forward.1} parent=0 // pred_check_branch
    %16 = sbr.rel (0) target = $region13
  $region12: #{mixhop_forward.1} parent=0 // pred_region
    _
  $region13: #{mixhop_forward.1} parent=0 // pred_fallthru
    _
  // Predicated region
  $region14: #{mixhop_forward.1} parent=0 // pred_check
    _
  $region15: #{mixhop_forward.1} parent=0 // pred_check_branch
    %18 = sbr.rel (0) target = $region17
  $region16: #{mixhop_forward.1} parent=0 // pred_region
    _
  $region17: #{mixhop_forward.1} parent=0 // pred_fallthru
    _
  // Predicated region
  $region18: #{mixhop_forward.1} parent=0 // pred_check
    _
  $region19: #{mixhop_forward.1} parent=0 // pred_check_branch
    %20 = sbr.rel (0) target = $region21
  $region20: #{mixhop_forward.1} parent=0 // pred_region
    _
  $region21: #{mixhop_forward.1} parent=0 // pred_fallthru
    _
  // Predicated region
  $region22: #{mixhop_forward.1} parent=0 // pred_check
    _
  $region23: #{mixhop_forward.1} parent=0 // pred_check_branch
    %22 = sbr.rel (0) target = $region25
  $region24: #{mixhop_forward.1} parent=0 // pred_region
    _
  $region25: #{mixhop_forward.1} parent=0 // pred_fallthru
    _
  %v24 = vld [vmem:[%s0] sm:$0xf]
  %v25 = vld [vmem:[%s0 + $0x4] sm:$0xf]
  %v26 = vld [vmem:[%s0 + $0x8] sm:$0xf]
  %v27 = vld [vmem:[%s0 + $0xc] sm:$0xf]
  %v28 = vld [vmem:[%s3] sm:$0xf]
  %v29 = vld [vmem:[%s3 + $0x4] sm:$0xf]
  %v30 = vld [vmem:[%s3 + $0x8] sm:$0xf]
  %v31 = vld [vmem:[%s3 + $0xc] sm:$0xf]
  %v32 = vld [vmem:[%s1] sm:$0xf]
  %v33 = vld [vmem:[%s1 + $0x4] sm:$0xf]
  %v34 = vld [vmem:[%s2] sm:$0x1]
  %v36 = vperm.slane %v34, 0
  %v42 = vunpack.c.l.b16 %v24
  %v43 = vunpack.c.l.b16 %v25
  %v44 = vunpack.c.l.b16 %v26
  %v45 = vunpack.c.l.b16 %v27
  %v46 = vpack.c.b16 %v43, %v42
  %v47 = vpack.c.b16 %v45, %v44
  %v50 = vunpack.c.l.b16 %v32
  %v51 = vunpack.c.l.b16 %v33
  %v52 = vpack.c.b16 %v51, %v50
  %vm54 = vcmask 130048
  %v56 = vsel %vm54, %v46, 0
  %v59 = vsel %vm54, %v47, 0
  %61 = vmatpush.bf16.msra.mxu0 0
  %62 = vmatpush.bf16.msra.mxu0 0
  %63 = vmatpush.bf16.msra.mxu0 0
  %64 = vmatpush.bf16.msra.mxu0 0
  %65 = vmatpush.bf16.msra.mxu0 0
  %66 = vmatpush.bf16.msra.mxu0 0
  %67 = vmatpush.bf16.msra.mxu0 0
  %68 = vmatpush.bf16.msra.mxu0 %v52
  %69 = vmatmul.bf16.gmra.mxu0 %v56
  %v70 = vpop.f32.mrf.mxu0
  %v71 = vadd.f32 %v36, %v70
  %v72 = vpop.f32.mrf.mxu0
  %v73 = vadd.f32 %v36, %v72
  %74 = vmatmul.bf16.gmra.mxu0 %v59
  %v75 = vpop.f32.mrf.mxu0
  %v76 = vadd.f32 %v36, %v75
  %v77 = vpop.f32.mrf.mxu0
  %v78 = vadd.f32 %v36, %v77
  %79 = vdwg.mxu0
  %v80 = vmax.f32 %v71, 0.0
  %v81 = vmax.f32 %v73, 0.0
  %v82 = vmax.f32 %v76, 0.0
  %v83 = vmax.f32 %v78, 0.0
  %v84 = vpack.c.bf16 %v73, %v71
  %v85 = vpack.c.bf16 %v78, %v76
  %v90 = vunpack.c.l.b16 %v28
  %v91 = vunpack.c.l.b16 %v29
  %v92 = vunpack.c.l.b16 %v30
  %v93 = vunpack.c.l.b16 %v31
  %v94 = vpack.c.b16 %v91, %v90
  %v95 = vpack.c.b16 %v93, %v92
  %98 = vrot.lane.b32.xlu0 %v84, 112
  %v99 = vpop.permute.xlu0 %98
  %100 = vrot.lane.b32.xlu0 %v85, 112
  %v101 = vpop.permute.xlu0 %100
  %vm104 = vcmask 261120
  %v106 = vsel %vm104, %v94, 0
  %v109 = vsel %vm104, %v95, 0
  %111 = vmatpush.bf16.msra.mxu0 0
  %112 = vmatpush.bf16.msra.mxu0 0
  %113 = vmatpush.bf16.msra.mxu0 0
  %114 = vmatpush.bf16.msra.mxu0 0
  %115 = vmatpush.bf16.msra.mxu0 0
  %116 = vmatpush.bf16.msra.mxu0 0
  %117 = vmatpush.bf16.msra.mxu0 %v101
  %118 = vmatpush.bf16.msra.mxu0 %v99
  %119 = vmatmul.bf16.gmra.mxu0 %v106
  %v120 = vpop.f32.mrf.mxu0
  %v121 = vadd.f32 0.0, %v120
  %v122 = vpop.f32.mrf.mxu0
  %v123 = vadd.f32 0.0, %v122
  %124 = vmatmul.bf16.gmra.mxu0 %v109
  %v125 = vpop.f32.mrf.mxu0
  %v126 = vadd.f32 0.0, %v125
  %v127 = vpop.f32.mrf.mxu0
  %v128 = vadd.f32 0.0, %v127
  %129 = vdwg.mxu0
  %v130 = vmax.f32 %v121, 0.0
  %v131 = vmax.f32 %v123, 0.0
  %v132 = vmax.f32 %v126, 0.0
  %v133 = vmax.f32 %v128, 0.0
  %v134 = vunpack.c.l.bf16 %v28
  %v135 = vunpack.c.l.bf16 %v29
  %v136 = vunpack.c.l.bf16 %v30
  %v137 = vunpack.c.l.bf16 %v31
  %v138 = vmul.f32 %v134, %v134
  %v139 = vmul.f32 %v135, %v135
  %v140 = vmul.f32 %v136, %v136
  %v141 = vmul.f32 %v137, %v137
  %v142 = vpack.c.bf16 %v139, %v138
  %v143 = vpack.c.bf16 %v141, %v140
  %144 = vrot.lane.b32.xlu0 %v84, 96
  %v145 = vpop.permute.xlu0 %144
  %146 = vrot.lane.b32.xlu0 %v85, 96
  %v147 = vpop.permute.xlu0 %146
  %v151 = vsel %vm104, %v142, 0
  %v154 = vsel %vm104, %v143, 0
  %156 = vmatpush.bf16.msra.mxu0 0
  %157 = vmatpush.bf16.msra.mxu0 0
  %158 = vmatpush.bf16.msra.mxu0 0
  %159 = vmatpush.bf16.msra.mxu0 0
  %160 = vmatpush.bf16.msra.mxu0 0
  %161 = vmatpush.bf16.msra.mxu0 0
  %162 = vmatpush.bf16.msra.mxu0 %v147
  %163 = vmatpush.bf16.msra.mxu0 %v145
  %164 = vmatmul.bf16.gmra.mxu0 %v151
  %v165 = vpop.f32.mrf.mxu0
  %v166 = vadd.f32 0.0, %v165
  %v167 = vpop.f32.mrf.mxu0
  %v168 = vadd.f32 0.0, %v167
  %169 = vmatmul.bf16.gmra.mxu0 %v154
  %v170 = vpop.f32.mrf.mxu0
  %v171 = vadd.f32 0.0, %v170
  %v172 = vpop.f32.mrf.mxu0
  %v173 = vadd.f32 0.0, %v172
  %174 = vdwg.mxu0
  %v175 = vmax.f32 %v166, 0.0
  %v176 = vmax.f32 %v168, 0.0
  %v177 = vmax.f32 %v171, 0.0
  %v178 = vmax.f32 %v173, 0.0
  %v179 = vpack.c.bf16 %v81, %v80
  %v180 = vpack.c.bf16 %v83, %v82
  %v181 = vld [vmem:[%s4] sm:$0xf]
  %v182 = vld [vmem:[%s4 + $0x4] sm:$0xf]
  %v183 = vpack.c.bf16 %v131, %v130
  %v184 = vpack.c.bf16 %v133, %v132
  %s185 = scalar_lea.vmem %s4, 8
  %v186 = vld [vmem:[%s185] sm:$0xf]
  %v187 = vld [vmem:[%s185 + $0x4] sm:$0xf]
  %v190 = vunpack.c.l.b16 %v186
  %v191 = vunpack.c.l.b16 %v187
  %v192 = vpack.c.b16 %v191, %v190
  %v195 = vsel %vm54, %v183, 0
  %v198 = vsel %vm54, %v184, 0
  %200 = vmatpush.bf16.msra.mxu0 0
  %201 = vmatpush.bf16.msra.mxu0 0
  %202 = vmatpush.bf16.msra.mxu0 0
  %203 = vmatpush.bf16.msra.mxu0 0
  %204 = vmatpush.bf16.msra.mxu0 0
  %205 = vmatpush.bf16.msra.mxu0 0
  %206 = vmatpush.bf16.msra.mxu0 0
  %207 = vmatpush.bf16.msra.mxu0 %v192
  %208 = vmatmul.bf16.gmra.mxu0 %v195
  %v209 = vpop.f32.mrf.mxu0
  %v210 = vadd.f32 0.0, %v209
  %v211 = vpop.f32.mrf.mxu0
  %v212 = vadd.f32 0.0, %v211
  %213 = vmatmul.bf16.gmra.mxu0 %v198
  %v214 = vpop.f32.mrf.mxu0
  %v215 = vadd.f32 0.0, %v214
  %v216 = vpop.f32.mrf.mxu0
  %v217 = vadd.f32 0.0, %v216
  %218 = vdwg.mxu0
  %v221 = vunpack.c.l.b16 %v181
  %v222 = vunpack.c.l.b16 %v182
  %v223 = vpack.c.b16 %v222, %v221
  %v226 = vsel %vm54, %v179, 0
  %v229 = vsel %vm54, %v180, 0
  %231 = vmatpush.bf16.msra.mxu0 0
  %232 = vmatpush.bf16.msra.mxu0 0
  %233 = vmatpush.bf16.msra.mxu0 0
  %234 = vmatpush.bf16.msra.mxu0 0
  %235 = vmatpush.bf16.msra.mxu0 0
  %236 = vmatpush.bf16.msra.mxu0 0
  %237 = vmatpush.bf16.msra.mxu0 0
  %238 = vmatpush.bf16.msra.mxu0 %v223
  %239 = vmatmul.bf16.gmra.mxu0 %v226
  %v240 = vpop.f32.mrf.mxu0
  %v241 = vadd.f32 %v210, %v240
  %v242 = vpop.f32.mrf.mxu0
  %v243 = vadd.f32 %v212, %v242
  %244 = vmatmul.bf16.gmra.mxu0 %v229
  %v245 = vpop.f32.mrf.mxu0
  %v246 = vadd.f32 %v215, %v245
  %v247 = vpop.f32.mrf.mxu0
  %v248 = vadd.f32 %v217, %v247
  %249 = vdwg.mxu0
  %v250 = vpack.c.bf16 %v176, %v175
  %v251 = vpack.c.bf16 %v178, %v177
  %s252 = scalar_lea.vmem %s4, 16
  %v253 = vld [vmem:[%s252] sm:$0xf]
  %v254 = vld [vmem:[%s252 + $0x4] sm:$0xf]
  %v257 = vunpack.c.l.b16 %v253
  %v258 = vunpack.c.l.b16 %v254
  %v259 = vpack.c.b16 %v258, %v257
  %v262 = vsel %vm54, %v250, 0
  %v265 = vsel %vm54, %v251, 0
  %267 = vmatpush.bf16.msra.mxu0 0
  %268 = vmatpush.bf16.msra.mxu0 0
  %269 = vmatpush.bf16.msra.mxu0 0
  %270 = vmatpush.bf16.msra.mxu0 0
  %271 = vmatpush.bf16.msra.mxu0 0
  %272 = vmatpush.bf16.msra.mxu0 0
  %273 = vmatpush.bf16.msra.mxu0 0
  %274 = vmatpush.bf16.msra.mxu0 %v259
  %275 = vmatmul.bf16.gmra.mxu0 %v262
  %v276 = vpop.f32.mrf.mxu0
  %v277 = vadd.f32 0.0, %v276
  %v278 = vpop.f32.mrf.mxu0
  %v279 = vadd.f32 0.0, %v278
  %280 = vmatmul.bf16.gmra.mxu0 %v265
  %v281 = vpop.f32.mrf.mxu0
  %v282 = vadd.f32 0.0, %v281
  %v283 = vpop.f32.mrf.mxu0
  %v284 = vadd.f32 0.0, %v283
  %285 = vdwg.mxu0
  %v286 = vadd.f32 %v241, %v277
  %v287 = vadd.f32 %v243, %v279
  %v288 = vadd.f32 %v246, %v282
  %v289 = vadd.f32 %v248, %v284
  %v290 = vld [vmem:[%s5] sm:$0x1]
  %v292 = vperm.slane %v290, 0
  %v294 = vadd.f32 %v286, %v292
  %v295 = vadd.f32 %v287, %v292
  %v296 = vadd.f32 %v288, %v292
  %v297 = vadd.f32 %v289, %v292
  %v298 = vpack.c.bf16 %v295, %v294
  %v299 = vpack.c.bf16 %v297, %v296
  %300 = vmatpush.bf16.msra.mxu0 0
  %301 = vmatpush.bf16.msra.mxu0 0
  %302 = vmatpush.bf16.msra.mxu0 0
  %303 = vmatpush.bf16.msra.mxu0 0
  %304 = vmatpush.bf16.msra.mxu0 0
  %305 = vmatpush.bf16.msra.mxu0 0
  %306 = vmatpush.bf16.msra.mxu0 %v299
  %307 = vmatpush.bf16.msra.mxu0 %v298
  %308 = vmatmul.bf16.gmra.mxu0 %v106
  %v309 = vpop.f32.mrf.mxu0
  %v310 = vadd.f32 0.0, %v309
  %v311 = vpop.f32.mrf.mxu0
  %v312 = vadd.f32 0.0, %v311
  %313 = vmatmul.bf16.gmra.mxu0 %v109
  %v314 = vpop.f32.mrf.mxu0
  %v315 = vadd.f32 0.0, %v314
  %v316 = vpop.f32.mrf.mxu0
  %v317 = vadd.f32 0.0, %v316
  %318 = vdwg.mxu0
  %vm319 = vcmask 64512
  %v320 = vsel %vm319, %v310, -inf
  %321 = vmax.xlane.f32.xlu0 %v320
  %v322 = vpop.xlane.xlu0 %321
  %v323 = vsel %vm319, %v312, -inf
  %324 = vmax.xlane.f32.xlu0 %v323
  %v325 = vpop.xlane.xlu0 %324
  %v326 = vsel %vm319, %v315, -inf
  %327 = vmax.xlane.f32.xlu0 %v326
  %v328 = vpop.xlane.xlu0 %327
  %v329 = vsel %vm319, %v317, -inf
  %330 = vmax.xlane.f32.xlu0 %v329
  %v331 = vpop.xlane.xlu0 %330
  %v332 = vsub.f32 %v310, %v322
  %v333 = vsub.f32 %v312, %v325
  %v334 = vsub.f32 %v315, %v328
  %v335 = vsub.f32 %v317, %v331
  %v336 = vmul.f32 %v332, 1.442695
  %v337 = vpow.pop %v336
  %v338 = vmul.f32 %v333, 1.442695
  %v339 = vpow.pop %v338
  %v340 = vmul.f32 %v334, 1.442695
  %v341 = vpow.pop %v340
  %v342 = vmul.f32 %v335, 1.442695
  %v343 = vpow.pop %v342
  %v344 = vsel %vm319, %v337, 0.0
  %345 = vadd.xlane.f32.xlu0 %v344
  %v346 = vpop.xlane.xlu0 %345
  %v347 = vsel %vm319, %v339, 0.0
  %348 = vadd.xlane.f32.xlu0 %v347
  %v349 = vpop.xlane.xlu0 %348
  %v350 = vsel %vm319, %v341, 0.0
  %351 = vadd.xlane.f32.xlu0 %v350
  %v352 = vpop.xlane.xlu0 %351
  %v353 = vsel %vm319, %v343, 0.0
  %354 = vadd.xlane.f32.xlu0 %v353
  %v355 = vpop.xlane.xlu0 %354
  %v356 = vlog2.pop %v346
  %v357 = vmul.f32 %v356, 0.6931472
  %v358 = vlog2.pop %v349
  %v359 = vmul.f32 %v358, 0.6931472
  %v360 = vlog2.pop %v352
  %v361 = vmul.f32 %v360, 0.6931472
  %v362 = vlog2.pop %v355
  %v363 = vmul.f32 %v362, 0.6931472
  %v364 = vadd.f32 %v357, %v322
  %v365 = vadd.f32 %v359, %v325
  %v366 = vadd.f32 %v361, %v328
  %v367 = vadd.f32 %v363, %v331
  %v368 = vsub.f32 %v310, %v364
  %v369 = vsub.f32 %v312, %v365
  %v370 = vsub.f32 %v315, %v366
  %v371 = vsub.f32 %v317, %v367
  %372 = vst.msk [vmem:[%s6] sm:$0xff] %vm319, %v368
  %373 = vst.msk [vmem:[%s6 + $0x8] sm:$0xff] %vm319, %v369
  %374 = vst.msk [vmem:[%s6 + $0x10] sm:$0xff] %vm319, %v370
  %375 = vst.msk [vmem:[%s6 + $0x18] sm:$0xff] %vm319, %v371
  // Predicated region
  $region26: #{mixhop_forward.1} parent=0 // pred_check
    _
  $region27: #{mixhop_forward.1} parent=0 // pred_check_branch
    %377 = sbr.rel (0) target = $region29
  $region28: #{mixhop_forward.1} parent=0 // pred_region
    _
  $region29: #{mixhop_forward.1} parent=0 // pred_fallthru
    _
  // Predicated region
  $region30: #{mixhop_forward.1} parent=0 // pred_check
    _
  $region31: #{mixhop_forward.1} parent=0 // pred_check_branch
    %379 = sbr.rel (0) target = $region33
  $region32: #{mixhop_forward.1} parent=0 // pred_region
    _
  $region33: #{mixhop_forward.1} parent=0 // pred_fallthru
    _

</llo_original>
